<compile_context>
chip_gen: v6e
topology: v6e:2x2x1
jax: 0.10.0
libtpu: 0.0.40
codegen_flags: <defaults>
</compile_context>

<pallas_src>
import functools

import jax
import jax.numpy as jnp
from jax.experimental import pallas as pl
from jax.experimental.pallas import tpu as pltpu


def _vae_fused_kernel(x_ref, cdt_ref, noise_ref,
                      w_mean_ref, b_mean_ref, w_logvar_ref, b_logvar_ref,
                      w2_ref, b2_ref,
                      out_ref, mean_ref, logvar_ref, *, sc):
    x = x_ref[0]                                   # (S, d_model)
    cdt = cdt_ref[0]                               # (Sc, d_latent)
    noise = noise_ref[0].astype(jnp.float32)       # (S, d_latent)

    # model2sample: two lane-dense matmuls (avoids slicing a fused
    # (S, 2*d_latent) result at lane offset d_latent inside VMEM).
    mean = jnp.dot(x, w_mean_ref[...],
                   preferred_element_type=jnp.float32) + b_mean_ref[...]
    logvar = jnp.dot(x, w_logvar_ref[...],
                     preferred_element_type=jnp.float32) + b_logvar_ref[...]

    std = jnp.exp(0.5 * logvar)                    # EUP, f32
    z = (mean + std * noise).astype(cdt.dtype)     # (S, d_latent), stays in VMEM

    # latent2model: write the cdt slab and the sampled slab straight into the
    # (Sc + S, d_model) output window (static slices -> zero-cost ref views),
    # so the concat never materializes anywhere.
    cdt_out = jnp.dot(cdt, w2_ref[...],
                      preferred_element_type=jnp.float32) + b2_ref[...]
    z_out = jnp.dot(z, w2_ref[...],
                    preferred_element_type=jnp.float32) + b2_ref[...]

    out_ref[0, :sc, :] = cdt_out.astype(out_ref.dtype)
    out_ref[0, sc:, :] = z_out.astype(out_ref.dtype)
    mean_ref[0] = mean.astype(mean_ref.dtype)
    logvar_ref[0] = logvar.astype(logvar_ref.dtype)


def vae_sample_forward(x, cdt, params, noise):
    """Pallas implementation of VAEsample.forward (batch_first=True).

    x:     (B, S, d_model)
    cdt:   (B, Sc, d_latent)
    noise: (B, S, d_latent)  standard-normal sample (RNG done in JAX glue)
    returns (out, latent_mean, latent_logvar)
    """
    B, S, d_model = x.shape
    Bc, Sc, d_latent = cdt.shape
    assert Bc == B
    dtype = x.dtype
    w1, b1, w2, b2 = params["w1"], params["b1"], params["w2"], params["b2"]
    itemsize = jnp.dtype(dtype).itemsize

    # Split model2sample weights once in the wrapper (trace-time slices on the
    # tiny weight tensors), so the kernel never lane-slices an intermediate.
    w_mean = w1[:, :d_latent]
    w_logvar = w1[:, d_latent:]
    b_mean = b1[:, :d_latent]
    b_logvar = b1[:, d_latent:]

    # VMEM budget: per-batch blocks (x, cdt, noise, out, mean, logvar) double
    # buffered + resident weights, with headroom; clamped for v7x's 64 MiB VMEM.
    per_block = (S * d_model + Sc * d_latent + S * d_latent
                 + (Sc + S) * d_model + 2 * S * d_latent) * itemsize
    weight_bytes = int(w1.size + b1.size + w2.size + b2.size) * itemsize
    need = 2 * (per_block + weight_bytes)
    vmem_limit = int(min(max(2 * need, 16 * 1024 * 1024), 64 * 1024 * 1024))

    flops = (2 * B * S * d_model * (2 * d_latent)
             + 2 * B * (Sc + S) * d_latent * d_model)
    bytes_accessed = int(x.size + cdt.size + noise.size
                         + w1.size + b1.size + w2.size + b2.size
                         + B * (Sc + S) * d_model + 2 * B * S * d_latent) * itemsize

    kernel = functools.partial(_vae_fused_kernel, sc=Sc)

    grid_spec = pltpu.PrefetchScalarGridSpec(
        num_scalar_prefetch=0,
        grid=(B,),
        in_specs=[
            pl.BlockSpec((1, S, d_model), lambda b: (b, 0, 0)),      # x
            pl.BlockSpec((1, Sc, d_latent), lambda b: (b, 0, 0)),    # cdt
            pl.BlockSpec((1, S, d_latent), lambda b: (b, 0, 0)),     # noise
            pl.BlockSpec((d_model, d_latent), lambda b: (0, 0)),     # w_mean (resident)
            pl.BlockSpec((1, d_latent), lambda b: (0, 0)),           # b_mean (resident)
            pl.BlockSpec((d_model, d_latent), lambda b: (0, 0)),     # w_logvar (resident)
            pl.BlockSpec((1, d_latent), lambda b: (0, 0)),           # b_logvar (resident)
            pl.BlockSpec((d_latent, d_model), lambda b: (0, 0)),     # w2 (resident)
            pl.BlockSpec((1, d_model), lambda b: (0, 0)),            # b2 (resident)
        ],
        out_specs=[
            pl.BlockSpec((1, Sc + S, d_model), lambda b: (b, 0, 0)),  # out
            pl.BlockSpec((1, S, d_latent), lambda b: (b, 0, 0)),      # mean
            pl.BlockSpec((1, S, d_latent), lambda b: (b, 0, 0)),      # logvar
        ],
    )

    out, latent_mean, latent_logvar = pl.pallas_call(
        kernel,
        out_shape=(
            jax.ShapeDtypeStruct((B, Sc + S, d_model), dtype),
            jax.ShapeDtypeStruct((B, S, d_latent), dtype),
            jax.ShapeDtypeStruct((B, S, d_latent), dtype),
        ),
        grid_spec=grid_spec,
        compiler_params=pltpu.CompilerParams(
            dimension_semantics=("parallel",),
            vmem_limit_bytes=vmem_limit,
        ),
        cost_estimate=pl.CostEstimate(
            flops=flops,
            transcendentals=B * S * d_latent,
            bytes_accessed=bytes_accessed,
        ),
    )(x, cdt, noise, w_mean, b_mean, w_logvar, b_logvar, w2, b2)
    return out, latent_mean, latent_logvar


def init_params(key, d_model, d_latent, dtype=jnp.float32):
    """Deterministic synthetic parameter init (shapes match nn.Linear)."""
    k1, k2, k3, k4 = jax.random.split(key, 4)
    # Stored transposed vs PyTorch: (in_features, out_features); biases (1, N).
    w1 = jax.random.normal(k1, (d_model, 2 * d_latent), dtype) * (1.0 / d_model ** 0.5)
    b1 = jax.random.normal(k2, (1, 2 * d_latent), dtype) * 0.01
    w2 = jax.random.normal(k3, (d_latent, d_model), dtype) * (1.0 / d_latent ** 0.5)
    b2 = jax.random.normal(k4, (1, d_model), dtype) * 0.01
    return {"w1": w1, "b1": b1, "w2": w2, "b2": b2}


def _reference_forward(x, cdt, params, noise):
    """Plain-JAX reference mirroring the PyTorch forward exactly."""
    d_latent = cdt.shape[-1]
    lin_out = x @ params["w1"] + params["b1"]
    latent_mean = lin_out[:, :, :d_latent]
    latent_logvar = lin_out[:, :, d_latent:]
    latent_std = jnp.exp(0.5 * latent_logvar)
    out = latent_mean + latent_std * noise
    out = jnp.concatenate((cdt, out), axis=1)
    out = out @ params["w2"] + params["b2"]
    return out, latent_mean, latent_logvar


if __name__ == "__main__":
    B, S, Sc = 2, 8, 8
    d_model, d_latent = 32, 16
    dtype = jnp.float32

    key = jax.random.PRNGKey(0)
    kx, kc, kn, kp = jax.random.split(key, 4)

    x = jax.random.normal(kx, (B, S, d_model), dtype)
    cdt = jax.random.normal(kc, (B, Sc, d_latent), dtype)
    # TODO(synk): torch.normal uses torch's RNG stream; here the N(0,1) sample is
    # drawn with JAX PRNG in the wrapper (same distribution, different stream).
    noise = jax.random.normal(kn, (B, S, d_latent), dtype)

    params = init_params(kp, d_model, d_latent, dtype)

    fwd = jax.jit(vae_sample_forward)
    out, mean, logvar = fwd(x, cdt, params, noise)
    jax.block_until_ready((out, mean, logvar))

    out_ref, mean_ref, logvar_ref = _reference_forward(x, cdt, params, noise)
    assert out.shape == (B, Sc + S, d_model)
    assert mean.shape == (B, S, d_latent)
    assert logvar.shape == (B, S, d_latent)
    assert jnp.allclose(out, out_ref, atol=1e-4, rtol=1e-4)
    assert jnp.allclose(mean, mean_ref, atol=1e-4, rtol=1e-4)
    assert jnp.allclose(logvar, logvar_ref, atol=1e-4, rtol=1e-4)

    print("KERNEL_OK")
</pallas_src>

<mosaic_0001>
module attributes {stable_mosaic.version = 11 : i64} {
  func.func @_vae_fused_kernel(%arg0: i32, %arg1: memref<1x8x32xf32, #tpu.memory_space<vmem>>, %arg2: memref<1x8x16xf32, #tpu.memory_space<vmem>>, %arg3: memref<1x8x16xf32, #tpu.memory_space<vmem>>, %arg4: memref<32x16xf32, #tpu.memory_space<vmem>>, %arg5: memref<1x16xf32, #tpu.memory_space<vmem>>, %arg6: memref<32x16xf32, #tpu.memory_space<vmem>>, %arg7: memref<1x16xf32, #tpu.memory_space<vmem>>, %arg8: memref<16x32xf32, #tpu.memory_space<vmem>>, %arg9: memref<1x32xf32, #tpu.memory_space<vmem>>, %arg10: memref<1x16x32xf32, #tpu.memory_space<vmem>>, %arg11: memref<1x8x16xf32, #tpu.memory_space<vmem>>, %arg12: memref<1x8x16xf32, #tpu.memory_space<vmem>>) attributes {dimension_semantics = [#tpu.dimension_semantics<parallel>], iteration_bounds = array<i64: 2>, scalar_prefetch = 0 : i64, scratch_operands = 0 : i64, tpu.core_type = #tpu.core_type<tc>, window_params = [{transform_indices = @transform_0, window_bounds = array<i64: 1, 8, 32>}, {transform_indices = @transform_1, window_bounds = array<i64: 1, 8, 16>}, {transform_indices = @transform_2, window_bounds = array<i64: 1, 8, 16>}, {pipeline_mode = #tpu.pipeline_mode<synchronous>, transform_indices = @transform_3, window_bounds = array<i64: 32, 16>}, {pipeline_mode = #tpu.pipeline_mode<synchronous>, transform_indices = @transform_4, window_bounds = array<i64: 1, 16>}, {pipeline_mode = #tpu.pipeline_mode<synchronous>, transform_indices = @transform_5, window_bounds = array<i64: 32, 16>}, {pipeline_mode = #tpu.pipeline_mode<synchronous>, transform_indices = @transform_6, window_bounds = array<i64: 1, 16>}, {pipeline_mode = #tpu.pipeline_mode<synchronous>, transform_indices = @transform_7, window_bounds = array<i64: 16, 32>}, {pipeline_mode = #tpu.pipeline_mode<synchronous>, transform_indices = @transform_8, window_bounds = array<i64: 1, 32>}, {transform_indices = @transform_9, window_bounds = array<i64: 1, 16, 32>}, {transform_indices = @transform_10, window_bounds = array<i64: 1, 8, 16>}, {transform_indices = @transform_11, window_bounds = array<i64: 1, 8, 16>}]} {
    %c0 = arith.constant 0 : index
    %c0_0 = arith.constant 0 : index
    %c0_1 = arith.constant 0 : index
    %0 = vector.load %arg1[%c0, %c0_0, %c0_1] : memref<1x8x32xf32, #tpu.memory_space<vmem>>, vector<1x8x32xf32>
    %1 = vector.shape_cast %0 : vector<1x8x32xf32> to vector<8x32xf32>
    %c0_2 = arith.constant 0 : index
    %c0_3 = arith.constant 0 : index
    %c0_4 = arith.constant 0 : index
    %2 = vector.load %arg2[%c0_2, %c0_3, %c0_4] : memref<1x8x16xf32, #tpu.memory_space<vmem>>, vector<1x8x16xf32>
    %3 = vector.shape_cast %2 : vector<1x8x16xf32> to vector<8x16xf32>
    %c0_5 = arith.constant 0 : index
    %c0_6 = arith.constant 0 : index
    %c0_7 = arith.constant 0 : index
    %4 = vector.load %arg3[%c0_5, %c0_6, %c0_7] : memref<1x8x16xf32, #tpu.memory_space<vmem>>, vector<1x8x16xf32>
    %5 = vector.shape_cast %4 : vector<1x8x16xf32> to vector<8x16xf32>
    %c0_8 = arith.constant 0 : index
    %c0_9 = arith.constant 0 : index
    %6 = vector.load %arg4[%c0_8, %c0_9] : memref<32x16xf32, #tpu.memory_space<vmem>>, vector<32x16xf32>
    %cst = arith.constant dense<0.000000e+00> : vector<8x16xf32>
    %7 = tpu.matmul %1, %6, %cst {dimension_numbers = #tpu.dot_dimension_numbers<[1], [0], [0], [1], [0, 0, 1, 1], [], []>} : vector<8x32xf32>, vector<32x16xf32>, vector<8x16xf32> -> vector<8x16xf32>
    %c0_10 = arith.constant 0 : index
    %c0_11 = arith.constant 0 : index
    %8 = vector.load %arg5[%c0_10, %c0_11] : memref<1x16xf32, #tpu.memory_space<vmem>>, vector<1x16xf32>
    %9 = vector.broadcast %8 : vector<1x16xf32> to vector<8x16xf32>
    %10 = arith.addf %7, %9 : vector<8x16xf32>
    %c0_12 = arith.constant 0 : index
    %c0_13 = arith.constant 0 : index
    %11 = vector.load %arg6[%c0_12, %c0_13] : memref<32x16xf32, #tpu.memory_space<vmem>>, vector<32x16xf32>
    %cst_14 = arith.constant dense<0.000000e+00> : vector<8x16xf32>
    %12 = tpu.matmul %1, %11, %cst_14 {dimension_numbers = #tpu.dot_dimension_numbers<[1], [0], [0], [1], [0, 0, 1, 1], [], []>} : vector<8x32xf32>, vector<32x16xf32>, vector<8x16xf32> -> vector<8x16xf32>
    %c0_15 = arith.constant 0 : index
    %c0_16 = arith.constant 0 : index
    %13 = vector.load %arg7[%c0_15, %c0_16] : memref<1x16xf32, #tpu.memory_space<vmem>>, vector<1x16xf32>
    %14 = vector.broadcast %13 : vector<1x16xf32> to vector<8x16xf32>
    %15 = arith.addf %12, %14 : vector<8x16xf32>
    %cst_17 = arith.constant 5.000000e-01 : f32
    %16 = vector.broadcast %cst_17 : f32 to vector<8x16xf32>
    %17 = arith.mulf %16, %15 : vector<8x16xf32>
    %18 = math.exp %17 : vector<8x16xf32>
    %19 = arith.mulf %18, %5 : vector<8x16xf32>
    %20 = arith.addf %10, %19 : vector<8x16xf32>
    %c0_18 = arith.constant 0 : index
    %c0_19 = arith.constant 0 : index
    %21 = vector.load %arg8[%c0_18, %c0_19] : memref<16x32xf32, #tpu.memory_space<vmem>>, vector<16x32xf32>
    %cst_20 = arith.constant dense<0.000000e+00> : vector<8x32xf32>
    %22 = tpu.matmul %3, %21, %cst_20 {dimension_numbers = #tpu.dot_dimension_numbers<[1], [0], [0], [1], [0, 0, 1, 1], [], []>} : vector<8x16xf32>, vector<16x32xf32>, vector<8x32xf32> -> vector<8x32xf32>
    %c0_21 = arith.constant 0 : index
    %c0_22 = arith.constant 0 : index
    %23 = vector.load %arg9[%c0_21, %c0_22] : memref<1x32xf32, #tpu.memory_space<vmem>>, vector<1x32xf32>
    %24 = vector.broadcast %23 : vector<1x32xf32> to vector<8x32xf32>
    %25 = arith.addf %22, %24 : vector<8x32xf32>
    %c0_23 = arith.constant 0 : index
    %c0_24 = arith.constant 0 : index
    %26 = vector.load %arg8[%c0_23, %c0_24] : memref<16x32xf32, #tpu.memory_space<vmem>>, vector<16x32xf32>
    %cst_25 = arith.constant dense<0.000000e+00> : vector<8x32xf32>
    %27 = tpu.matmul %20, %26, %cst_25 {dimension_numbers = #tpu.dot_dimension_numbers<[1], [0], [0], [1], [0, 0, 1, 1], [], []>} : vector<8x16xf32>, vector<16x32xf32>, vector<8x32xf32> -> vector<8x32xf32>
    %c0_26 = arith.constant 0 : index
    %c0_27 = arith.constant 0 : index
    %28 = vector.load %arg9[%c0_26, %c0_27] : memref<1x32xf32, #tpu.memory_space<vmem>>, vector<1x32xf32>
    %29 = vector.broadcast %28 : vector<1x32xf32> to vector<8x32xf32>
    %30 = arith.addf %27, %29 : vector<8x32xf32>
    %c0_28 = arith.constant 0 : index
    %c0_29 = arith.constant 0 : index
    %c0_30 = arith.constant 0 : index
    %31 = vector.load %arg10[%c0_28, %c0_29, %c0_30] : memref<1x16x32xf32, #tpu.memory_space<vmem>>, vector<1x8x32xf32>
    %32 = vector.shape_cast %31 : vector<1x8x32xf32> to vector<8x32xf32>
    %33 = vector.shape_cast %25 : vector<8x32xf32> to vector<1x8x32xf32>
    tpu.vector_store %arg10[%c0_28, %c0_29, %c0_30], %33 {strides = array<i32>} : memref<1x16x32xf32, #tpu.memory_space<vmem>>, vector<1x8x32xf32>,
    %c0_31 = arith.constant 0 : index
    %c8 = arith.constant 8 : index
    %c0_32 = arith.constant 0 : index
    %34 = vector.load %arg10[%c0_31, %c8, %c0_32] : memref<1x16x32xf32, #tpu.memory_space<vmem>>, vector<1x8x32xf32>
    %35 = vector.shape_cast %34 : vector<1x8x32xf32> to vector<8x32xf32>
    %36 = vector.shape_cast %30 : vector<8x32xf32> to vector<1x8x32xf32>
    tpu.vector_store %arg10[%c0_31, %c8, %c0_32], %36 {strides = array<i32>} : memref<1x16x32xf32, #tpu.memory_space<vmem>>, vector<1x8x32xf32>,
    %c0_33 = arith.constant 0 : index
    %c0_34 = arith.constant 0 : index
    %c0_35 = arith.constant 0 : index
    %37 = vector.load %arg11[%c0_33, %c0_34, %c0_35] : memref<1x8x16xf32, #tpu.memory_space<vmem>>, vector<1x8x16xf32>
    %38 = vector.shape_cast %37 : vector<1x8x16xf32> to vector<8x16xf32>
    %39 = vector.shape_cast %10 : vector<8x16xf32> to vector<1x8x16xf32>
    tpu.vector_store %arg11[%c0_33, %c0_34, %c0_35], %39 {strides = array<i32>} : memref<1x8x16xf32, #tpu.memory_space<vmem>>, vector<1x8x16xf32>,
    %c0_36 = arith.constant 0 : index
    %c0_37 = arith.constant 0 : index
    %c0_38 = arith.constant 0 : index
    %40 = vector.load %arg12[%c0_36, %c0_37, %c0_38] : memref<1x8x16xf32, #tpu.memory_space<vmem>>, vector<1x8x16xf32>
    %41 = vector.shape_cast %40 : vector<1x8x16xf32> to vector<8x16xf32>
    %42 = vector.shape_cast %15 : vector<8x16xf32> to vector<1x8x16xf32>
    tpu.vector_store %arg12[%c0_36, %c0_37, %c0_38], %42 {strides = array<i32>} : memref<1x8x16xf32, #tpu.memory_space<vmem>>, vector<1x8x16xf32>,
    return
  }
  func.func @transform_0(%arg0: i32) -> (i32, i32, i32) {
    %c0_i32 = arith.constant 0 : i32
    %c0_i32_0 = arith.constant 0 : i32
    %c0_i32_1 = arith.constant 0 : i32
    return %arg0, %c0_i32, %c0_i32_0 : i32, i32, i32
  }
  func.func @transform_1(%arg0: i32) -> (i32, i32, i32) {
    %c0_i32 = arith.constant 0 : i32
    %c0_i32_0 = arith.constant 0 : i32
    %c0_i32_1 = arith.constant 0 : i32
    return %arg0, %c0_i32, %c0_i32_0 : i32, i32, i32
  }
  func.func @transform_2(%arg0: i32) -> (i32, i32, i32) {
    %c0_i32 = arith.constant 0 : i32
    %c0_i32_0 = arith.constant 0 : i32
    %c0_i32_1 = arith.constant 0 : i32
    return %arg0, %c0_i32, %c0_i32_0 : i32, i32, i32
  }
  func.func @transform_3(%arg0: i32) -> (i32, i32) {
    %c0_i32 = arith.constant 0 : i32
    %c0_i32_0 = arith.constant 0 : i32
    %c0_i32_1 = arith.constant 0 : i32
    return %c0_i32, %c0_i32_0 : i32, i32
  }
  func.func @transform_4(%arg0: i32) -> (i32, i32) {
    %c0_i32 = arith.constant 0 : i32
    %c0_i32_0 = arith.constant 0 : i32
    %c0_i32_1 = arith.constant 0 : i32
    return %c0_i32, %c0_i32_0 : i32, i32
  }
  func.func @transform_5(%arg0: i32) -> (i32, i32) {
    %c0_i32 = arith.constant 0 : i32
    %c0_i32_0 = arith.constant 0 : i32
    %c0_i32_1 = arith.constant 0 : i32
    return %c0_i32, %c0_i32_0 : i32, i32
  }
  func.func @transform_6(%arg0: i32) -> (i32, i32) {
    %c0_i32 = arith.constant 0 : i32
    %c0_i32_0 = arith.constant 0 : i32
    %c0_i32_1 = arith.constant 0 : i32
    return %c0_i32, %c0_i32_0 : i32, i32
  }
  func.func @transform_7(%arg0: i32) -> (i32, i32) {
    %c0_i32 = arith.constant 0 : i32
    %c0_i32_0 = arith.constant 0 : i32
    %c0_i32_1 = arith.constant 0 : i32
    return %c0_i32, %c0_i32_0 : i32, i32
  }
  func.func @transform_8(%arg0: i32) -> (i32, i32) {
    %c0_i32 = arith.constant 0 : i32
    %c0_i32_0 = arith.constant 0 : i32
    %c0_i32_1 = arith.constant 0 : i32
    return %c0_i32, %c0_i32_0 : i32, i32
  }
  func.func @transform_9(%arg0: i32) -> (i32, i32, i32) {
    %c0_i32 = arith.constant 0 : i32
    %c0_i32_0 = arith.constant 0 : i32
    %c0_i32_1 = arith.constant 0 : i32
    return %arg0, %c0_i32, %c0_i32_0 : i32, i32, i32
  }
  func.func @transform_10(%arg0: i32) -> (i32, i32, i32) {
    %c0_i32 = arith.constant 0 : i32
    %c0_i32_0 = arith.constant 0 : i32
    %c0_i32_1 = arith.constant 0 : i32
    return %arg0, %c0_i32, %c0_i32_0 : i32, i32, i32
  }
  func.func @transform_11(%arg0: i32) -> (i32, i32, i32) {
    %c0_i32 = arith.constant 0 : i32
    %c0_i32_0 = arith.constant 0 : i32
    %c0_i32_1 = arith.constant 0 : i32
    return %arg0, %c0_i32, %c0_i32_0 : i32, i32, i32
  }
}

</mosaic_0001>

<llo_original>
// kernel: vae_sample_forward.1
$region0: #{vae_sample_forward.1}
  #allocation0 [shape = 'u32[]', space=smem, size = 0x4, offset = 0x4, fixed_abs, tag = 'smem constant byte address 0x4 - core index']
  #allocation1 [shape = 'u32[144,128]{1,0:T(1,128)}', space=vmem, size = 0x12000, scoped, tag = 'internal scratch']
  %s0 = inlined_call_operand.vmem [shape: f32[2,8,32], index: 0, kind: input, shape index: {}]
  %s1 = inlined_call_operand.vmem [shape: f32[2,8,16], index: 1, kind: input, shape index: {}]
  %s2 = inlined_call_operand.vmem [shape: f32[2,8,16], index: 2, kind: input, shape index: {}]
  %s3 = inlined_call_operand.vmem [shape: f32[32,16], index: 3, kind: input, shape index: {}]
  %s4 = inlined_call_operand.vmem [shape: f32[1,16], index: 4, kind: input, shape index: {}]
  %s5 = inlined_call_operand.vmem [shape: f32[32,16], index: 5, kind: input, shape index: {}]
  %s6 = inlined_call_operand.vmem [shape: f32[1,16], index: 6, kind: input, shape index: {}]
  %s7 = inlined_call_operand.vmem [shape: f32[16,32], index: 7, kind: input, shape index: {}]
  %s8 = inlined_call_operand.vmem [shape: f32[1,32], index: 8, kind: input, shape index: {}]
  %s9 = inlined_call_operand.hbm [shape: f32[2,16,32], index: 9, kind: output, shape index: {0}]
  %s10 = inlined_call_operand.hbm [shape: f32[2,8,16], index: 10, kind: output, shape index: {1}]
  %s11 = inlined_call_operand.hbm [shape: f32[2,8,16], index: 11, kind: output, shape index: {2}]
  %12 = xla_tuple %s9, %s10, %s11
  %s13 = sld [smem:[#allocation0]]
  $region85: #{vae_sample_forward.1} parent=0
    _
  %s15 = ssub.s32 1, %s13
  %s16 = scalar_select 0, %s15, %s13
  $region1: #{vae_sample_forward.1} parent=0
    #allocation2 [shape = 'u8[16384]{0}', space=vmem, size = 0x4000, scoped, tag = 'output window, operand 0']
    #allocation3 [shape = 's32[2]{0}', space=sflag, size = 0x8, scoped, tag = 'scoped memory for vae_sample_forward.1']
    #allocation4 [shape = 'u8[8192]{0}', space=vmem, size = 0x2000, scoped, tag = 'output window, operand 1']
    #allocation5 [shape = 's32[2]{0}', space=sflag, size = 0x8, scoped, tag = 'scoped memory for vae_sample_forward.1']
    #allocation6 [shape = 'u8[8192]{0}', space=vmem, size = 0x2000, scoped, tag = 'output window, operand 2']
    %17 = vsyncpa [#allocation3], 0
    %s18 = scalar_lea.sflag [#allocation3], 1
    %19 = vsyncpa %s18, 0
    %20 = vsyncpa [#allocation5], 0
    %s21 = scalar_lea.sflag [#allocation5], 1
    %22 = vsyncpa %s21, 0
    loop: start=0, step=1, limit=4
    $region2: #{vae_sample_forward.1} parent=1 // loop_pre_header
      _
    $region3: #{vae_sample_forward.1} parent=1 // loop_header
      %s24 = sphi 0, %s28
      %p25 = scmp.ge.s32.totalorder %s24, 4
      %s34 = sphi 0, %s36
      %s37 = sphi 0, %s34
      %s38 = sphi 0, %s37
      %s54 = sphi 0, %s38
      %s60 = sphi 0, %s62
      %s63 = sphi 0, %s60
      %s64 = sphi 0, %s63
      %s80 = sphi 0, %s64
      %s86 = sphi 0, %s88
      %s89 = sphi 0, %s86
      %s90 = sphi 0, %s89
      %s106 = sphi 0, %s90
      %s110 = sphi 0, %s110
      %s112 = sphi 0, %s110
      %s113 = sphi 0, %s112
      %s127 = sphi 0, %s113
      %s131 = sphi 0, %s131
      %s133 = sphi 0, %s131
      %s134 = sphi 0, %s133
      %s148 = sphi 0, %s134
      %s152 = sphi 0, %s152
      %s154 = sphi 0, %s152
      %s155 = sphi 0, %s154
      %s169 = sphi 0, %s155
      %s173 = sphi 0, %s173
      %s175 = sphi 0, %s173
      %s176 = sphi 0, %s175
      %s190 = sphi 0, %s176
      %s194 = sphi 0, %s194
      %s196 = sphi 0, %s194
      %s197 = sphi 0, %s196
      %s211 = sphi 0, %s197
      %s215 = sphi 0, %s215
      %s217 = sphi 0, %s215
      %s218 = sphi 0, %s217
      %s232 = sphi 0, %s218
      %s238 = sphi 0, %s240
      %s241 = sphi 0, %s238
      %s242 = sphi 0, %s241
      %s258 = sphi 0, %s242
      %s264 = sphi 0, %s266
      %s267 = sphi 0, %s264
      %s268 = sphi 0, %s267
      %s284 = sphi 0, %s268
      %s290 = sphi 0, %s292
      %s293 = sphi 0, %s290
      %s294 = sphi 0, %s293
      %s310 = sphi 0, %s294
    $region4: #{vae_sample_forward.1} parent=1 // loop_header_branch
      %27 = sbr.rel (%p25) target = $region8
    $region5: #{vae_sample_forward.1} parent=1 // loop_body
      %s29 = ssub.s32 %s24, 1
      %s30 = ssub.s32 %s24, 2
      %s31 = sadd.s32 %s24, 1
      %s32 = ssub.s32 %s24, %s31
      %p33 = scmp.eq.s32.totalorder %s32, 0
      %s35 = sadd.s32 %s34, 1
      %s36 = scalar_select %p33, %s34, %s35
      %p39 = pneg %p33
      %p40 = scmp.eq.s32.totalorder %s24, 1
      %p41 = por %p39, %p40
      %p42 = scmp.ne.s32.totalorder %s34, %s37
      %p43 = scmp.eq.s32.totalorder %s24, 0
      %p44 = por %p42, %p43
      %p45 = scmp.ne.s32.totalorder %s34, %s37
      %p46 = scmp.eq.s32.totalorder %s29, 1
      %p47 = por %p45, %p46
      %p48 = scmp.ne.s32.totalorder %s37, %s38
      %p49 = scmp.eq.s32.totalorder %s29, 0
      %p50 = por %p48, %p49
      %p51 = scmp.ne.s32.totalorder %s37, %s38
      %p52 = scmp.eq.s32.totalorder %s30, 1
      %p53 = por %p51, %p52
      %p55 = scmp.ne.s32.totalorder %s38, %s54
      %p56 = scmp.eq.s32.totalorder %s30, 0
      %p57 = por %p55, %p56
      %s58 = ssub.s32 %s24, %s31
      %p59 = scmp.eq.s32.totalorder %s58, 0
      %s61 = sadd.s32 %s60, 1
      %s62 = scalar_select %p59, %s60, %s61
      %p65 = pneg %p59
      %p66 = scmp.eq.s32.totalorder %s24, 1
      %p67 = por %p65, %p66
      %p68 = scmp.ne.s32.totalorder %s60, %s63
      %p69 = scmp.eq.s32.totalorder %s24, 0
      %p70 = por %p68, %p69
      %p71 = scmp.ne.s32.totalorder %s60, %s63
      %p72 = scmp.eq.s32.totalorder %s29, 1
      %p73 = por %p71, %p72
      %p74 = scmp.ne.s32.totalorder %s63, %s64
      %p75 = scmp.eq.s32.totalorder %s29, 0
      %p76 = por %p74, %p75
      %p77 = scmp.ne.s32.totalorder %s63, %s64
      %p78 = scmp.eq.s32.totalorder %s30, 1
      %p79 = por %p77, %p78
      %p81 = scmp.ne.s32.totalorder %s64, %s80
      %p82 = scmp.eq.s32.totalorder %s30, 0
      %p83 = por %p81, %p82
      %s84 = ssub.s32 %s24, %s31
      %p85 = scmp.eq.s32.totalorder %s84, 0
      %s87 = sadd.s32 %s86, 1
      %s88 = scalar_select %p85, %s86, %s87
      %p91 = pneg %p85
      %p92 = scmp.eq.s32.totalorder %s24, 1
      %p93 = por %p91, %p92
      %p94 = scmp.ne.s32.totalorder %s86, %s89
      %p95 = scmp.eq.s32.totalorder %s24, 0
      %p96 = por %p94, %p95
      %p97 = scmp.ne.s32.totalorder %s86, %s89
      %p98 = scmp.eq.s32.totalorder %s29, 1
      %p99 = por %p97, %p98
      %p100 = scmp.ne.s32.totalorder %s89, %s90
      %p101 = scmp.eq.s32.totalorder %s29, 0
      %p102 = por %p100, %p101
      %p103 = scmp.ne.s32.totalorder %s89, %s90
      %p104 = scmp.eq.s32.totalorder %s30, 1
      %p105 = por %p103, %p104
      %p107 = scmp.ne.s32.totalorder %s90, %s106
      %p108 = scmp.eq.s32.totalorder %s30, 0
      %p109 = por %p107, %p108
      %s111 = sadd.s32 %s110, 1
      %p114 = scmp.eq.s32.totalorder %s24, 1
      %p115 = scmp.ne.s32.totalorder %s110, %s112
      %p116 = scmp.eq.s32.totalorder %s24, 0
      %p117 = por %p115, %p116
      %p118 = scmp.ne.s32.totalorder %s110, %s112
      %p119 = scmp.eq.s32.totalorder %s29, 1
      %p120 = por %p118, %p119
      %p121 = scmp.ne.s32.totalorder %s112, %s113
      %p122 = scmp.eq.s32.totalorder %s29, 0
      %p123 = por %p121, %p122
      %p124 = scmp.ne.s32.totalorder %s112, %s113
      %p125 = scmp.eq.s32.totalorder %s30, 1
      %p126 = por %p124, %p125
      %p128 = scmp.ne.s32.totalorder %s113, %s127
      %p129 = scmp.eq.s32.totalorder %s30, 0
      %p130 = por %p128, %p129
      %s132 = sadd.s32 %s131, 1
      %p135 = scmp.eq.s32.totalorder %s24, 1
      %p136 = scmp.ne.s32.totalorder %s131, %s133
      %p137 = scmp.eq.s32.totalorder %s24, 0
      %p138 = por %p136, %p137
      %p139 = scmp.ne.s32.totalorder %s131, %s133
      %p140 = scmp.eq.s32.totalorder %s29, 1
      %p141 = por %p139, %p140
      %p142 = scmp.ne.s32.totalorder %s133, %s134
      %p143 = scmp.eq.s32.totalorder %s29, 0
      %p144 = por %p142, %p143
      %p145 = scmp.ne.s32.totalorder %s133, %s134
      %p146 = scmp.eq.s32.totalorder %s30, 1
      %p147 = por %p145, %p146
      %p149 = scmp.ne.s32.totalorder %s134, %s148
      %p150 = scmp.eq.s32.totalorder %s30, 0
      %p151 = por %p149, %p150
      %s153 = sadd.s32 %s152, 1
      %p156 = scmp.eq.s32.totalorder %s24, 1
      %p157 = scmp.ne.s32.totalorder %s152, %s154
      %p158 = scmp.eq.s32.totalorder %s24, 0
      %p159 = por %p157, %p158
      %p160 = scmp.ne.s32.totalorder %s152, %s154
      %p161 = scmp.eq.s32.totalorder %s29, 1
      %p162 = por %p160, %p161
      %p163 = scmp.ne.s32.totalorder %s154, %s155
      %p164 = scmp.eq.s32.totalorder %s29, 0
      %p165 = por %p163, %p164
      %p166 = scmp.ne.s32.totalorder %s154, %s155
      %p167 = scmp.eq.s32.totalorder %s30, 1
      %p168 = por %p166, %p167
      %p170 = scmp.ne.s32.totalorder %s155, %s169
      %p171 = scmp.eq.s32.totalorder %s30, 0
      %p172 = por %p170, %p171
      %s174 = sadd.s32 %s173, 1
      %p177 = scmp.eq.s32.totalorder %s24, 1
      %p178 = scmp.ne.s32.totalorder %s173, %s175
      %p179 = scmp.eq.s32.totalorder %s24, 0
      %p180 = por %p178, %p179
      %p181 = scmp.ne.s32.totalorder %s173, %s175
      %p182 = scmp.eq.s32.totalorder %s29, 1
      %p183 = por %p181, %p182
      %p184 = scmp.ne.s32.totalorder %s175, %s176
      %p185 = scmp.eq.s32.totalorder %s29, 0
      %p186 = por %p184, %p185
      %p187 = scmp.ne.s32.totalorder %s175, %s176
      %p188 = scmp.eq.s32.totalorder %s30, 1
      %p189 = por %p187, %p188
      %p191 = scmp.ne.s32.totalorder %s176, %s190
      %p192 = scmp.eq.s32.totalorder %s30, 0
      %p193 = por %p191, %p192
      %s195 = sadd.s32 %s194, 1
      %p198 = scmp.eq.s32.totalorder %s24, 1
      %p199 = scmp.ne.s32.totalorder %s194, %s196
      %p200 = scmp.eq.s32.totalorder %s24, 0
      %p201 = por %p199, %p200
      %p202 = scmp.ne.s32.totalorder %s194, %s196
      %p203 = scmp.eq.s32.totalorder %s29, 1
      %p204 = por %p202, %p203
      %p205 = scmp.ne.s32.totalorder %s196, %s197
      %p206 = scmp.eq.s32.totalorder %s29, 0
      %p207 = por %p205, %p206
      %p208 = scmp.ne.s32.totalorder %s196, %s197
      %p209 = scmp.eq.s32.totalorder %s30, 1
      %p210 = por %p208, %p209
      %p212 = scmp.ne.s32.totalorder %s197, %s211
      %p213 = scmp.eq.s32.totalorder %s30, 0
      %p214 = por %p212, %p213
      %s216 = sadd.s32 %s215, 1
      %p219 = scmp.eq.s32.totalorder %s24, 1
      %p220 = scmp.ne.s32.totalorder %s215, %s217
      %p221 = scmp.eq.s32.totalorder %s24, 0
      %p222 = por %p220, %p221
      %p223 = scmp.ne.s32.totalorder %s215, %s217
      %p224 = scmp.eq.s32.totalorder %s29, 1
      %p225 = por %p223, %p224
      %p226 = scmp.ne.s32.totalorder %s217, %s218
      %p227 = scmp.eq.s32.totalorder %s29, 0
      %p228 = por %p226, %p227
      %p229 = scmp.ne.s32.totalorder %s217, %s218
      %p230 = scmp.eq.s32.totalorder %s30, 1
      %p231 = por %p229, %p230
      %p233 = scmp.ne.s32.totalorder %s218, %s232
      %p234 = scmp.eq.s32.totalorder %s30, 0
      %p235 = por %p233, %p234
      %s236 = ssub.s32 %s24, %s31
      %p237 = scmp.eq.s32.totalorder %s236, 0
      %s239 = sadd.s32 %s238, 1
      %s240 = scalar_select %p237, %s238, %s239
      %p243 = pneg %p237
      %p244 = scmp.eq.s32.totalorder %s24, 1
      %p245 = por %p243, %p244
      %p246 = scmp.ne.s32.totalorder %s238, %s241
      %p247 = scmp.eq.s32.totalorder %s24, 0
      %p248 = por %p246, %p247
      %p249 = scmp.ne.s32.totalorder %s238, %s241
      %p250 = scmp.eq.s32.totalorder %s29, 1
      %p251 = por %p249, %p250
      %p252 = scmp.ne.s32.totalorder %s241, %s242
      %p253 = scmp.eq.s32.totalorder %s29, 0
      %p254 = por %p252, %p253
      %p255 = scmp.ne.s32.totalorder %s241, %s242
      %p256 = scmp.eq.s32.totalorder %s30, 1
      %p257 = por %p255, %p256
      %p259 = scmp.ne.s32.totalorder %s242, %s258
      %p260 = scmp.eq.s32.totalorder %s30, 0
      %p261 = por %p259, %p260
      %s262 = ssub.s32 %s24, %s31
      %p263 = scmp.eq.s32.totalorder %s262, 0
      %s265 = sadd.s32 %s264, 1
      %s266 = scalar_select %p263, %s264, %s265
      %p269 = pneg %p263
      %p270 = scmp.eq.s32.totalorder %s24, 1
      %p271 = por %p269, %p270
      %p272 = scmp.ne.s32.totalorder %s264, %s267
      %p273 = scmp.eq.s32.totalorder %s24, 0
      %p274 = por %p272, %p273
      %p275 = scmp.ne.s32.totalorder %s264, %s267
      %p276 = scmp.eq.s32.totalorder %s29, 1
      %p277 = por %p275, %p276
      %p278 = scmp.ne.s32.totalorder %s267, %s268
      %p279 = scmp.eq.s32.totalorder %s29, 0
      %p280 = por %p278, %p279
      %p281 = scmp.ne.s32.totalorder %s267, %s268
      %p282 = scmp.eq.s32.totalorder %s30, 1
      %p283 = por %p281, %p282
      %p285 = scmp.ne.s32.totalorder %s268, %s284
      %p286 = scmp.eq.s32.totalorder %s30, 0
      %p287 = por %p285, %p286
      %s288 = ssub.s32 %s24, %s31
      %p289 = scmp.eq.s32.totalorder %s288, 0
      %s291 = sadd.s32 %s290, 1
      %s292 = scalar_select %p289, %s290, %s291
      %p295 = pneg %p289
      %p296 = scmp.eq.s32.totalorder %s24, 1
      %p297 = por %p295, %p296
      %p298 = scmp.ne.s32.totalorder %s290, %s293
      %p299 = scmp.eq.s32.totalorder %s24, 0
      %p300 = por %p298, %p299
      %p301 = scmp.ne.s32.totalorder %s290, %s293
      %p302 = scmp.eq.s32.totalorder %s29, 1
      %p303 = por %p301, %p302
      %p304 = scmp.ne.s32.totalorder %s293, %s294
      %p305 = scmp.eq.s32.totalorder %s29, 0
      %p306 = por %p304, %p305
      %p307 = scmp.ne.s32.totalorder %s293, %s294
      %p308 = scmp.eq.s32.totalorder %s30, 1
      %p309 = por %p307, %p308
      %p311 = scmp.ne.s32.totalorder %s294, %s310
      %p312 = scmp.eq.s32.totalorder %s30, 0
      %p313 = por %p311, %p312
      %p314 = scmp.le.s32.totalorder 1, %s24
      %p315 = scmp.lt.s32.totalorder %s24, 3
      %p316 = pnand %p314, %p315
      %p317 = pneg %p316
      // Predicated region
      $region9: #{vae_sample_forward.1} parent=5 // pred_check
        _
      $region10: #{vae_sample_forward.1} parent=5 // pred_check_branch
        %319 = sbr.rel (%p316) target = $region12
      $region11: #{vae_sample_forward.1} parent=5 // pred_region
        %s320 = ssub.s32 %s24, 1
        // Predicated region
        $region13: #{vae_sample_forward.1} parent=11 // pred_check
          %p321 = pneg %p123
        $region14: #{vae_sample_forward.1} parent=11 // pred_check_branch
          %323 = sbr.rel (%p321) target = $region16
        $region15: #{vae_sample_forward.1} parent=11 // pred_region
          _
        $region16: #{vae_sample_forward.1} parent=11 // pred_fallthru
          _
        // Predicated region
        $region17: #{vae_sample_forward.1} parent=11 // pred_check
          %p324 = pneg %p144
        $region18: #{vae_sample_forward.1} parent=11 // pred_check_branch
          %326 = sbr.rel (%p324) target = $region20
        $region19: #{vae_sample_forward.1} parent=11 // pred_region
          _
        $region20: #{vae_sample_forward.1} parent=11 // pred_fallthru
          _
        // Predicated region
        $region21: #{vae_sample_forward.1} parent=11 // pred_check
          %p327 = pneg %p165
        $region22: #{vae_sample_forward.1} parent=11 // pred_check_branch
          %329 = sbr.rel (%p327) target = $region24
        $region23: #{vae_sample_forward.1} parent=11 // pred_region
          _
        $region24: #{vae_sample_forward.1} parent=11 // pred_fallthru
          _
        // Predicated region
        $region25: #{vae_sample_forward.1} parent=11 // pred_check
          %p330 = pneg %p186
        $region26: #{vae_sample_forward.1} parent=11 // pred_check_branch
          %332 = sbr.rel (%p330) target = $region28
        $region27: #{vae_sample_forward.1} parent=11 // pred_region
          _
        $region28: #{vae_sample_forward.1} parent=11 // pred_fallthru
          _
        // Predicated region
        $region29: #{vae_sample_forward.1} parent=11 // pred_check
          %p333 = pneg %p207
        $region30: #{vae_sample_forward.1} parent=11 // pred_check_branch
          %335 = sbr.rel (%p333) target = $region32
        $region31: #{vae_sample_forward.1} parent=11 // pred_region
          _
        $region32: #{vae_sample_forward.1} parent=11 // pred_fallthru
          _
        // Predicated region
        $region33: #{vae_sample_forward.1} parent=11 // pred_check
          %p336 = pneg %p228
        $region34: #{vae_sample_forward.1} parent=11 // pred_check_branch
          %338 = sbr.rel (%p336) target = $region36
        $region35: #{vae_sample_forward.1} parent=11 // pred_region
          _
        $region36: #{vae_sample_forward.1} parent=11 // pred_fallthru
          _
      $region12: #{vae_sample_forward.1} parent=5 // pred_fallthru
        _
      %p339 = scmp.lt.s32.totalorder %s24, 2
      // Predicated region
      $region37: #{vae_sample_forward.1} parent=5 // pred_check
        %p340 = pneg %p339
      $region38: #{vae_sample_forward.1} parent=5 // pred_check_branch
        %342 = sbr.rel (%p340) target = $region40
      $region39: #{vae_sample_forward.1} parent=5 // pred_region
        // Predicated region
        $region41: #{vae_sample_forward.1} parent=39 // pred_check
          %p343 = pneg %p44
        $region42: #{vae_sample_forward.1} parent=39 // pred_check_branch
          %345 = sbr.rel (%p343) target = $region44
        $region43: #{vae_sample_forward.1} parent=39 // pred_region
          %p346 = scmp.lt.s32.totalorder %s24, 1
          %s347 = scalar_select %p346, %s24, 1
          %s348 = smul.addr %s347, 8
          %s349 = scalar_lea.vmem %s0, %s348
        $region44: #{vae_sample_forward.1} parent=39 // pred_fallthru
          _
        // Predicated region
        $region45: #{vae_sample_forward.1} parent=39 // pred_check
          %p350 = pneg %p70
        $region46: #{vae_sample_forward.1} parent=39 // pred_check_branch
          %352 = sbr.rel (%p350) target = $region48
        $region47: #{vae_sample_forward.1} parent=39 // pred_region
          %p353 = scmp.lt.s32.totalorder %s24, 1
          %s354 = scalar_select %p353, %s24, 1
          %s355 = smul.addr %s354, 8
          %s356 = scalar_lea.vmem %s1, %s355
        $region48: #{vae_sample_forward.1} parent=39 // pred_fallthru
          _
        // Predicated region
        $region49: #{vae_sample_forward.1} parent=39 // pred_check
          %p357 = pneg %p96
        $region50: #{vae_sample_forward.1} parent=39 // pred_check_branch
          %359 = sbr.rel (%p357) target = $region52
        $region51: #{vae_sample_forward.1} parent=39 // pred_region
          %p360 = scmp.lt.s32.totalorder %s24, 1
          %s361 = scalar_select %p360, %s24, 1
          %s362 = smul.addr %s361, 8
          %s363 = scalar_lea.vmem %s2, %s362
        $region52: #{vae_sample_forward.1} parent=39 // pred_fallthru
          _
      $region40: #{vae_sample_forward.1} parent=5 // pred_fallthru
        _
      %p364 = scmp.le.s32.totalorder 1, %s24
      %p365 = scmp.lt.s32.totalorder %s24, 3
      %p366 = pnand %p364, %p365
      %p367 = pneg %p366
      // Predicated region
      $region53: #{vae_sample_forward.1} parent=5 // pred_check
        _
      $region54: #{vae_sample_forward.1} parent=5 // pred_check_branch
        %369 = sbr.rel (%p366) target = $region56
      $region55: #{vae_sample_forward.1} parent=5 // pred_region
        %s370 = ssub.s32 %s24, 1
        %p371 = scmp.lt.s32.totalorder %s29, 1
        %s372 = scalar_select %p371, %s29, 1
        %s373 = smul.addr %s372, 8
        %s374 = scalar_lea.vmem %s0, %s373
        %p375 = pneg %p50
        %p376 = pneg %p47
        %p377 = scmp.lt.s32.totalorder %s29, 1
        %s378 = scalar_select %p377, %s29, 1
        %s379 = smul.addr %s378, 8
        %s380 = scalar_lea.vmem %s1, %s379
        %p381 = pneg %p76
        %p382 = pneg %p73
        %p383 = scmp.lt.s32.totalorder %s29, 1
        %s384 = scalar_select %p383, %s29, 1
        %s385 = smul.addr %s384, 8
        %s386 = scalar_lea.vmem %s2, %s385
        %p387 = pneg %p102
        %p388 = pneg %p99
        %p389 = pneg %p123
        %p390 = pneg %p120
        %p391 = pneg %p144
        %p392 = pneg %p141
        %p393 = pneg %p165
        %p394 = pneg %p162
        %p395 = pneg %p186
        %p396 = pneg %p183
        %p397 = pneg %p207
        %p398 = pneg %p204
        %p399 = pneg %p228
        %p400 = pneg %p225
        %p401 = pneg %p254
        %p402 = pneg %p251
        %s403 = sand.u32 %s241, 1
        %s404 = scalar_lea.sflag [#allocation3], %s403
        %s405 = sand.u32 %s241, 1
        %s406 = smul.addr %s405, 16
        %s407 = scalar_lea.vmem [#allocation2], %s406
        %p408 = pneg %p280
        %p409 = pneg %p277
        %s410 = sand.u32 %s29, 1
        %s411 = scalar_lea.sflag [#allocation5], %s410
        %s412 = sand.u32 %s267, 1
        %s413 = smul.addr %s412, 8
        %s414 = scalar_lea.vmem [#allocation4], %s413
        %p415 = pneg %p306
        %p416 = pneg %p303
        %s417 = sand.u32 %s29, 1
        %s418 = scalar_lea.sflag [#allocation5], %s417
        %s419 = sand.u32 %s293, 1
        %s420 = smul.addr %s419, 8
        %s421 = scalar_lea.vmem [#allocation6], %s420
        %p422 = scmp.lt.s32.totalorder %s29, 1
        %s423 = scalar_select %p422, %s29, 1
        %s424 = smul.addr %s423, 8
        %s425 = scalar_lea.vmem %s0, %s424
        %p426 = scmp.lt.s32.totalorder %s29, 1
        %s427 = scalar_select %p426, %s29, 1
        %s428 = smul.addr %s427, 8
        %s429 = scalar_lea.vmem %s1, %s428
        %p430 = scmp.lt.s32.totalorder %s29, 1
        %s431 = scalar_select %p430, %s29, 1
        %s432 = smul.addr %s431, 8
        %s433 = scalar_lea.vmem %s2, %s432
        %v434 = vld [vmem:[%s425] sm:$0xff]
        %v435 = vld [vmem:[%s429] sm:$0xff]
        %v436 = vld [vmem:[%s433] sm:$0xff]
        %v437 = vld [vmem:[%s3] sm:$0xff]
        %v438 = vld [vmem:[%s3 + $0x8] sm:$0xff]
        %v439 = vld [vmem:[%s3 + $0x10] sm:$0xff]
        %v440 = vld [vmem:[%s3 + $0x18] sm:$0xff]
        %v441 = vld [vmem:[%s4] sm:$0x1]
        %v443 = vlaneseq
        %v444 = vshrl.u32 %v443, 7
        %v445 = vsub.s32 0, %v444
        %v446 = vrot.slane %v441, %v445
        %vm448 = vcmask 261120
        %v450 = vsel %vm448, %v434, 0
        %452 = vmatprep.subr.mxu0 0.0
        %453 = vmatpush1.msra.mxu0 0.0
        %454 = vmatprep.subr.mxu0 0.0
        %455 = vmatpush1.msra.mxu0 0.0
        %456 = vmatprep.subr.mxu0 0.0
        %457 = vmatpush1.msra.mxu0 0.0
        %458 = vmatprep.subr.mxu0 0.0
        %459 = vmatpush1.msra.mxu0 0.0
        %460 = vmatprep.subr.mxu0 0.0
        %461 = vmatpush1.msra.mxu0 0.0
        %462 = vmatprep.subr.mxu0 0.0
        %463 = vmatpush1.msra.mxu0 0.0
        %464 = vmatprep.subr.mxu0 0.0
        %465 = vmatpush1.msra.mxu0 0.0
        %466 = vmatprep.subr.mxu0 0.0
        %467 = vmatpush1.msra.mxu0 0.0
        %468 = vmatprep.subr.mxu0 0.0
        %469 = vmatpush1.msra.mxu0 0.0
        %470 = vmatprep.subr.mxu0 0.0
        %471 = vmatpush1.msra.mxu0 0.0
        %472 = vmatprep.subr.mxu0 0.0
        %473 = vmatpush1.msra.mxu0 0.0
        %474 = vmatprep.subr.mxu0 0.0
        %475 = vmatpush1.msra.mxu0 0.0
        %476 = vmatprep.subr.mxu0 0.0
        %477 = vmatpush1.msra.mxu0 %v440
        %478 = vmatprep.subr.mxu0 0.0
        %479 = vmatpush1.msra.mxu0 %v439
        %480 = vmatprep.subr.mxu0 0.0
        %481 = vmatpush1.msra.mxu0 %v438
        %482 = vmatprep.subr.mxu0 0.0
        %483 = vmatpush1.msra.mxu0 %v437
        %484 = vmatprep.subr.mxu0 0.0
        %485 = vmatpush2.msra.mxu0 0.0
        %486 = vmatprep.subr.mxu0 0.0
        %487 = vmatpush2.msra.mxu0 0.0
        %488 = vmatprep.subr.mxu0 0.0
        %489 = vmatpush2.msra.mxu0 0.0
        %490 = vmatprep.subr.mxu0 0.0
        %491 = vmatpush2.msra.mxu0 0.0
        %492 = vmatprep.subr.mxu0 0.0
        %493 = vmatpush2.msra.mxu0 0.0
        %494 = vmatprep.subr.mxu0 0.0
        %495 = vmatpush2.msra.mxu0 0.0
        %496 = vmatprep.subr.mxu0 0.0
        %497 = vmatpush2.msra.mxu0 0.0
        %498 = vmatprep.subr.mxu0 0.0
        %499 = vmatpush2.msra.mxu0 0.0
        %500 = vmatprep.subr.mxu0 0.0
        %501 = vmatpush2.msra.mxu0 0.0
        %502 = vmatprep.subr.mxu0 0.0
        %503 = vmatpush2.msra.mxu0 0.0
        %504 = vmatprep.subr.mxu0 0.0
        %505 = vmatpush2.msra.mxu0 0.0
        %506 = vmatprep.subr.mxu0 0.0
        %507 = vmatpush2.msra.mxu0 0.0
        %508 = vmatprep.subr.mxu0 0.0
        %509 = vmatpush2.msra.mxu0 0.0
        %510 = vmatprep.subr.mxu0 0.0
        %511 = vmatpush2.msra.mxu0 0.0
        %512 = vmatprep.subr.mxu0 0.0
        %513 = vmatpush2.msra.mxu0 0.0
        %514 = vmatprep.subr.mxu0 0.0
        %515 = vmatpush2.msra.mxu0 0.0
        %516 = vmatprep.mubr.f32.mxu0 0.0
        %517 = vmatmul.mubr.f32.gmra.mxu0 %v450
        %v518 = vpop.f32.mrf.mxu0
        %v519 = vadd.f32 %v446, %v518
        %v520 = vpop.f32.mrf.mxu0
        %521 = vdwg.mxu0
        %v522 = vld [vmem:[%s5] sm:$0xff]
        %v523 = vld [vmem:[%s5 + $0x8] sm:$0xff]
        %v524 = vld [vmem:[%s5 + $0x10] sm:$0xff]
        %v525 = vld [vmem:[%s5 + $0x18] sm:$0xff]
        %v526 = vld [vmem:[%s6] sm:$0x1]
        %v528 = vlaneseq
        %v529 = vshrl.u32 %v528, 7
        %v530 = vsub.s32 0, %v529
        %v531 = vrot.slane %v526, %v530
        %533 = vmatprep.subr.mxu0 0.0
        %534 = vmatpush1.msra.mxu0 0.0
        %535 = vmatprep.subr.mxu0 0.0
        %536 = vmatpush1.msra.mxu0 0.0
        %537 = vmatprep.subr.mxu0 0.0
        %538 = vmatpush1.msra.mxu0 0.0
        %539 = vmatprep.subr.mxu0 0.0
        %540 = vmatpush1.msra.mxu0 0.0
        %541 = vmatprep.subr.mxu0 0.0
        %542 = vmatpush1.msra.mxu0 0.0
        %543 = vmatprep.subr.mxu0 0.0
        %544 = vmatpush1.msra.mxu0 0.0
        %545 = vmatprep.subr.mxu0 0.0
        %546 = vmatpush1.msra.mxu0 0.0
        %547 = vmatprep.subr.mxu0 0.0
        %548 = vmatpush1.msra.mxu0 0.0
        %549 = vmatprep.subr.mxu0 0.0
        %550 = vmatpush1.msra.mxu0 0.0
        %551 = vmatprep.subr.mxu0 0.0
        %552 = vmatpush1.msra.mxu0 0.0
        %553 = vmatprep.subr.mxu0 0.0
        %554 = vmatpush1.msra.mxu0 0.0
        %555 = vmatprep.subr.mxu0 0.0
        %556 = vmatpush1.msra.mxu0 0.0
        %557 = vmatprep.subr.mxu0 0.0
        %558 = vmatpush1.msra.mxu0 %v525
        %559 = vmatprep.subr.mxu0 0.0
        %560 = vmatpush1.msra.mxu0 %v524
        %561 = vmatprep.subr.mxu0 0.0
        %562 = vmatpush1.msra.mxu0 %v523
        %563 = vmatprep.subr.mxu0 0.0
        %564 = vmatpush1.msra.mxu0 %v522
        %565 = vmatprep.subr.mxu0 0.0
        %566 = vmatpush2.msra.mxu0 0.0
        %567 = vmatprep.subr.mxu0 0.0
        %568 = vmatpush2.msra.mxu0 0.0
        %569 = vmatprep.subr.mxu0 0.0
        %570 = vmatpush2.msra.mxu0 0.0
        %571 = vmatprep.subr.mxu0 0.0
        %572 = vmatpush2.msra.mxu0 0.0
        %573 = vmatprep.subr.mxu0 0.0
        %574 = vmatpush2.msra.mxu0 0.0
        %575 = vmatprep.subr.mxu0 0.0
        %576 = vmatpush2.msra.mxu0 0.0
        %577 = vmatprep.subr.mxu0 0.0
        %578 = vmatpush2.msra.mxu0 0.0
        %579 = vmatprep.subr.mxu0 0.0
        %580 = vmatpush2.msra.mxu0 0.0
        %581 = vmatprep.subr.mxu0 0.0
        %582 = vmatpush2.msra.mxu0 0.0
        %583 = vmatprep.subr.mxu0 0.0
        %584 = vmatpush2.msra.mxu0 0.0
        %585 = vmatprep.subr.mxu0 0.0
        %586 = vmatpush2.msra.mxu0 0.0
        %587 = vmatprep.subr.mxu0 0.0
        %588 = vmatpush2.msra.mxu0 0.0
        %589 = vmatprep.subr.mxu0 0.0
        %590 = vmatpush2.msra.mxu0 0.0
        %591 = vmatprep.subr.mxu0 0.0
        %592 = vmatpush2.msra.mxu0 0.0
        %593 = vmatprep.subr.mxu0 0.0
        %594 = vmatpush2.msra.mxu0 0.0
        %595 = vmatprep.subr.mxu0 0.0
        %596 = vmatpush2.msra.mxu0 0.0
        %597 = vmatprep.mubr.f32.mxu0 0.0
        %598 = vmatmul.mubr.f32.gmra.mxu0 %v450
        %v599 = vpop.f32.mrf.mxu0
        %v600 = vadd.f32 %v531, %v599
        %v601 = vpop.f32.mrf.mxu0
        %602 = vdwg.mxu0
        %v603 = vmul.f32 %v600, 0.5
        %v604 = vmul.f32 %v603, 1.442695
        %v605 = vpow.pop %v604
        %v606 = vmul.f32 %v605, %v436
        %v607 = vadd.f32 %v519, %v606
        %v608 = vld [vmem:[%s7] sm:$0xff]
        %v609 = vld [vmem:[%s7 + $0x8] sm:$0xff]
        %v610 = vld [vmem:[%s8] sm:$0x1]
        %v612 = vlaneseq
        %v613 = vshrl.u32 %v612, 7
        %v614 = vsub.s32 0, %v613
        %v615 = vrot.slane %v610, %v614
        %vm617 = vcmask 130048
        %v619 = vsel %vm617, %v435, 0
        %621 = vmatprep.subr.mxu0 0.0
        %622 = vmatpush1.msra.mxu0 0.0
        %623 = vmatprep.subr.mxu0 0.0
        %624 = vmatpush1.msra.mxu0 0.0
        %625 = vmatprep.subr.mxu0 0.0
        %626 = vmatpush1.msra.mxu0 0.0
        %627 = vmatprep.subr.mxu0 0.0
        %628 = vmatpush1.msra.mxu0 0.0
        %629 = vmatprep.subr.mxu0 0.0
        %630 = vmatpush1.msra.mxu0 0.0
        %631 = vmatprep.subr.mxu0 0.0
        %632 = vmatpush1.msra.mxu0 0.0
        %633 = vmatprep.subr.mxu0 0.0
        %634 = vmatpush1.msra.mxu0 0.0
        %635 = vmatprep.subr.mxu0 0.0
        %636 = vmatpush1.msra.mxu0 0.0
        %637 = vmatprep.subr.mxu0 0.0
        %638 = vmatpush1.msra.mxu0 0.0
        %639 = vmatprep.subr.mxu0 0.0
        %640 = vmatpush1.msra.mxu0 0.0
        %641 = vmatprep.subr.mxu0 0.0
        %642 = vmatpush1.msra.mxu0 0.0
        %643 = vmatprep.subr.mxu0 0.0
        %644 = vmatpush1.msra.mxu0 0.0
        %645 = vmatprep.subr.mxu0 0.0
        %646 = vmatpush1.msra.mxu0 0.0
        %647 = vmatprep.subr.mxu0 0.0
        %648 = vmatpush1.msra.mxu0 0.0
        %649 = vmatprep.subr.mxu0 0.0
        %650 = vmatpush1.msra.mxu0 %v609
        %651 = vmatprep.subr.mxu0 0.0
        %652 = vmatpush1.msra.mxu0 %v608
        %653 = vmatprep.subr.mxu0 0.0
        %654 = vmatpush2.msra.mxu0 0.0
        %655 = vmatprep.subr.mxu0 0.0
        %656 = vmatpush2.msra.mxu0 0.0
        %657 = vmatprep.subr.mxu0 0.0
        %658 = vmatpush2.msra.mxu0 0.0
        %659 = vmatprep.subr.mxu0 0.0
        %660 = vmatpush2.msra.mxu0 0.0
        %661 = vmatprep.subr.mxu0 0.0
        %662 = vmatpush2.msra.mxu0 0.0
        %663 = vmatprep.subr.mxu0 0.0
        %664 = vmatpush2.msra.mxu0 0.0
        %665 = vmatprep.subr.mxu0 0.0
        %666 = vmatpush2.msra.mxu0 0.0
        %667 = vmatprep.subr.mxu0 0.0
        %668 = vmatpush2.msra.mxu0 0.0
        %669 = vmatprep.subr.mxu0 0.0
        %670 = vmatpush2.msra.mxu0 0.0
        %671 = vmatprep.subr.mxu0 0.0
        %672 = vmatpush2.msra.mxu0 0.0
        %673 = vmatprep.subr.mxu0 0.0
        %674 = vmatpush2.msra.mxu0 0.0
        %675 = vmatprep.subr.mxu0 0.0
        %676 = vmatpush2.msra.mxu0 0.0
        %677 = vmatprep.subr.mxu0 0.0
        %678 = vmatpush2.msra.mxu0 0.0
        %679 = vmatprep.subr.mxu0 0.0
        %680 = vmatpush2.msra.mxu0 0.0
        %681 = vmatprep.subr.mxu0 0.0
        %682 = vmatpush2.msra.mxu0 0.0
        %683 = vmatprep.subr.mxu0 0.0
        %684 = vmatpush2.msra.mxu0 0.0
        %685 = vmatprep.mubr.f32.mxu0 0.0
        %686 = vmatmul.mubr.f32.gmra.mxu0 %v619
        %v687 = vpop.f32.mrf.mxu0
        %v688 = vadd.f32 %v615, %v687
        %v689 = vpop.f32.mrf.mxu0
        %690 = vdwg.mxu0
        %v692 = vsel %vm617, %v607, 0
        %694 = vmatprep.subr.mxu0 0.0
        %695 = vmatpush1.msra.mxu0 0.0
        %696 = vmatprep.subr.mxu0 0.0
        %697 = vmatpush1.msra.mxu0 0.0
        %698 = vmatprep.subr.mxu0 0.0
        %699 = vmatpush1.msra.mxu0 0.0
        %700 = vmatprep.subr.mxu0 0.0
        %701 = vmatpush1.msra.mxu0 0.0
        %702 = vmatprep.subr.mxu0 0.0
        %703 = vmatpush1.msra.mxu0 0.0
        %704 = vmatprep.subr.mxu0 0.0
        %705 = vmatpush1.msra.mxu0 0.0
        %706 = vmatprep.subr.mxu0 0.0
        %707 = vmatpush1.msra.mxu0 0.0
        %708 = vmatprep.subr.mxu0 0.0
        %709 = vmatpush1.msra.mxu0 0.0
        %710 = vmatprep.subr.mxu0 0.0
        %711 = vmatpush1.msra.mxu0 0.0
        %712 = vmatprep.subr.mxu0 0.0
        %713 = vmatpush1.msra.mxu0 0.0
        %714 = vmatprep.subr.mxu0 0.0
        %715 = vmatpush1.msra.mxu0 0.0
        %716 = vmatprep.subr.mxu0 0.0
        %717 = vmatpush1.msra.mxu0 0.0
        %718 = vmatprep.subr.mxu0 0.0
        %719 = vmatpush1.msra.mxu0 0.0
        %720 = vmatprep.subr.mxu0 0.0
        %721 = vmatpush1.msra.mxu0 0.0
        %722 = vmatprep.subr.mxu0 0.0
        %723 = vmatpush1.msra.mxu0 %v609
        %724 = vmatprep.subr.mxu0 0.0
        %725 = vmatpush1.msra.mxu0 %v608
        %726 = vmatprep.subr.mxu0 0.0
        %727 = vmatpush2.msra.mxu0 0.0
        %728 = vmatprep.subr.mxu0 0.0
        %729 = vmatpush2.msra.mxu0 0.0
        %730 = vmatprep.subr.mxu0 0.0
        %731 = vmatpush2.msra.mxu0 0.0
        %732 = vmatprep.subr.mxu0 0.0
        %733 = vmatpush2.msra.mxu0 0.0
        %734 = vmatprep.subr.mxu0 0.0
        %735 = vmatpush2.msra.mxu0 0.0
        %736 = vmatprep.subr.mxu0 0.0
        %737 = vmatpush2.msra.mxu0 0.0
        %738 = vmatprep.subr.mxu0 0.0
        %739 = vmatpush2.msra.mxu0 0.0
        %740 = vmatprep.subr.mxu0 0.0
        %741 = vmatpush2.msra.mxu0 0.0
        %742 = vmatprep.subr.mxu0 0.0
        %743 = vmatpush2.msra.mxu0 0.0
        %744 = vmatprep.subr.mxu0 0.0
        %745 = vmatpush2.msra.mxu0 0.0
        %746 = vmatprep.subr.mxu0 0.0
        %747 = vmatpush2.msra.mxu0 0.0
        %748 = vmatprep.subr.mxu0 0.0
        %749 = vmatpush2.msra.mxu0 0.0
        %750 = vmatprep.subr.mxu0 0.0
        %751 = vmatpush2.msra.mxu0 0.0
        %752 = vmatprep.subr.mxu0 0.0
        %753 = vmatpush2.msra.mxu0 0.0
        %754 = vmatprep.subr.mxu0 0.0
        %755 = vmatpush2.msra.mxu0 0.0
        %756 = vmatprep.subr.mxu0 0.0
        %757 = vmatpush2.msra.mxu0 0.0
        %758 = vmatprep.mubr.f32.mxu0 0.0
        %759 = vmatmul.mubr.f32.gmra.mxu0 %v692
        %v760 = vpop.f32.mrf.mxu0
        %v761 = vadd.f32 %v615, %v760
        %v762 = vpop.f32.mrf.mxu0
        %763 = vdwg.mxu0
        %764 = vst.msk [vmem:[%s407] sm:$0xff] %vm448, %v688
        %765 = vst.msk [vmem:[%s407 + $0x8] sm:$0xff] %vm448, %v761
        %766 = vst.msk [vmem:[%s414] sm:$0xff] %vm617, %v519
        %767 = vst.msk [vmem:[%s421] sm:$0xff] %vm617, %v600
        %s768 = sand.u32 %s241, 1
        %s769 = scalar_lea.sflag [#allocation3], %s768
        %s770 = sand.u32 %s241, 1
        %s771 = smul.addr %s770, 16
        %s772 = scalar_lea.vmem [#allocation2], %s771
        %s773 = sand.u32 %s29, 1
        %s774 = scalar_lea.sflag [#allocation5], %s773
        %s775 = sand.u32 %s267, 1
        %s776 = smul.addr %s775, 8
        %s777 = scalar_lea.vmem [#allocation4], %s776
        %s778 = sand.u32 %s29, 1
        %s779 = scalar_lea.sflag [#allocation5], %s778
        %s780 = sand.u32 %s293, 1
        %s781 = smul.addr %s780, 8
        %s782 = scalar_lea.vmem [#allocation6], %s781
        // Predicated region
        $region57: #{vae_sample_forward.1} parent=55 // pred_check
          %p783 = pneg %p251
        $region58: #{vae_sample_forward.1} parent=55 // pred_check_branch
          %785 = sbr.rel (%p783) target = $region60
        $region59: #{vae_sample_forward.1} parent=55 // pred_region
          %s787 = ssub.s32 256, 256
          %788 = vsyncadd %s769, %s787
          %s789 = smul.addr %s29, 2
          %s790 = smul.addr %s789, 128
          %s791 = scalar_lea.hbm %s9, %s790
          %s792 = sshll.u32 %s772, 4
          %s793 = int_to_ptr.vmem [resolvable:$true] %s792
          %798 = dma.vmem_to_hbm [thread:$0]  %s793, 256, %s791, %s769, 128, 128, 8
        $region60: #{vae_sample_forward.1} parent=55 // pred_fallthru
          _
        // Predicated region
        $region61: #{vae_sample_forward.1} parent=55 // pred_check
          %p799 = pneg %p277
        $region62: #{vae_sample_forward.1} parent=55 // pred_check_branch
          %801 = sbr.rel (%p799) target = $region64
        $region63: #{vae_sample_forward.1} parent=55 // pred_region
          %s803 = ssub.s32 128, 128
          %804 = vsyncadd %s774, %s803
          %s805 = smul.addr %s29, 128
          %s806 = scalar_lea.hbm %s10, %s805
          %s808 = sshll.u32 %s777, 4
          %s809 = int_to_ptr.vmem [resolvable:$true] %s808
          %811 = dma.vmem_to_hbm [thread:$0]  %s809, 128, %s806, %s774
        $region64: #{vae_sample_forward.1} parent=55 // pred_fallthru
          _
        // Predicated region
        $region65: #{vae_sample_forward.1} parent=55 // pred_check
          %p812 = pneg %p303
        $region66: #{vae_sample_forward.1} parent=55 // pred_check_branch
          %814 = sbr.rel (%p812) target = $region68
        $region67: #{vae_sample_forward.1} parent=55 // pred_region
          %s816 = ssub.s32 128, 128
          %817 = vsyncadd %s779, %s816
          %s818 = smul.addr %s29, 128
          %s819 = scalar_lea.hbm %s11, %s818
          %s821 = sshll.u32 %s782, 4
          %s822 = int_to_ptr.vmem [resolvable:$true] %s821
          %824 = dma.vmem_to_hbm [thread:$0]  %s822, 128, %s819, %s779
        $region68: #{vae_sample_forward.1} parent=55 // pred_fallthru
          _
      $region56: #{vae_sample_forward.1} parent=5 // pred_fallthru
        _
      %p825 = scmp.le.s32.totalorder 2, %s24
      // Predicated region
      $region69: #{vae_sample_forward.1} parent=5 // pred_check
        %p826 = pneg %p825
      $region70: #{vae_sample_forward.1} parent=5 // pred_check_branch
        %828 = sbr.rel (%p826) target = $region72
      $region71: #{vae_sample_forward.1} parent=5 // pred_region
        %s829 = ssub.s32 %s24, 2
        // Predicated region
        $region73: #{vae_sample_forward.1} parent=71 // pred_check
          %p830 = pneg %p257
        $region74: #{vae_sample_forward.1} parent=71 // pred_check_branch
          %832 = sbr.rel (%p830) target = $region76
        $region75: #{vae_sample_forward.1} parent=71 // pred_region
          %s833 = sand.u32 %s242, 1
          %s834 = scalar_lea.sflag [#allocation3], %s833
          %s835 = sand.u32 %s242, 1
          %s836 = smul.addr %s835, 16
          %s837 = scalar_lea.vmem [#allocation2], %s836
          %838 = dma.done %s834, 256
        $region76: #{vae_sample_forward.1} parent=71 // pred_fallthru
          _
        // Predicated region
        $region77: #{vae_sample_forward.1} parent=71 // pred_check
          %p839 = pneg %p283
        $region78: #{vae_sample_forward.1} parent=71 // pred_check_branch
          %841 = sbr.rel (%p839) target = $region80
        $region79: #{vae_sample_forward.1} parent=71 // pred_region
          %s842 = sand.u32 %s30, 1
          %s843 = scalar_lea.sflag [#allocation5], %s842
          %s844 = sand.u32 %s268, 1
          %s845 = smul.addr %s844, 8
          %s846 = scalar_lea.vmem [#allocation4], %s845
          %847 = dma.done %s843, 128
        $region80: #{vae_sample_forward.1} parent=71 // pred_fallthru
          _
        // Predicated region
        $region81: #{vae_sample_forward.1} parent=71 // pred_check
          %p848 = pneg %p309
        $region82: #{vae_sample_forward.1} parent=71 // pred_check_branch
          %850 = sbr.rel (%p848) target = $region84
        $region83: #{vae_sample_forward.1} parent=71 // pred_region
          %s851 = sand.u32 %s30, 1
          %s852 = scalar_lea.sflag [#allocation5], %s851
          %s853 = sand.u32 %s294, 1
          %s854 = smul.addr %s853, 8
          %s855 = scalar_lea.vmem [#allocation6], %s854
          %856 = dma.done %s852, 128
        $region84: #{vae_sample_forward.1} parent=71 // pred_fallthru
          _
      $region72: #{vae_sample_forward.1} parent=5 // pred_fallthru
        _
    $region6: #{vae_sample_forward.1} parent=1 // loop_footer
      %s28 = sadd.s32 1, %s24
    $region7: #{vae_sample_forward.1} parent=1 // loop_footer_branch
      %23 = sbr.rel target = $region3
    $region8: #{vae_sample_forward.1} parent=1 // loop_exit
      _
    %857 = vsyncpa [#allocation3], 1
    %s858 = scalar_lea.sflag [#allocation3], 1
    %859 = vsyncpa %s858, 1
    %860 = vsyncpa [#allocation5], 1
    %s861 = scalar_lea.sflag [#allocation5], 1
    %862 = vsyncpa %s861, 1

</llo_original>
